<compile_context>
chip_gen: v7x
topology: tpu7x:2x2x1
jax: 0.10.0
libtpu: 0.0.40
codegen_flags: <defaults>
</compile_context>

<pallas_src>
import functools

import jax
import jax.numpy as jnp
import numpy as np
from jax import lax
from jax.experimental import pallas as pl
from jax.experimental.pallas import tpu as pltpu

EPS = 1e-5          # torch BatchNorm2d default
NEG_SLOPE = 0.01    # torch LeakyReLU default


# --------------- Fused kernel: tconv GEMM + BN stats + BN/LeakyReLU ---------------

def _decoder_kernel(w_ref, cols_ref, g_ref, b_ref, o_ref, sum_ref, ssq_ref,
                    *, inv_m, tm):
    m = pl.program_id(0)
    last = pl.num_programs(0) - 1

    @pl.when(m == 0)
    def _():
        sum_ref[...] = jnp.zeros_like(sum_ref)
        ssq_ref[...] = jnp.zeros_like(ssq_ref)

    # (Cout, K) @ (K, tm) -> (Cout, tm); spatial dim on lanes -> lane-dense stores.
    acc = jnp.dot(w_ref[...], cols_ref[...], preferred_element_type=jnp.float32)

    # o_ref is the FULL (Cout, Mp) output block, resident in VMEM across the grid.
    off = pl.multiple_of(m * tm, tm)
    o_ref[:, pl.ds(off, tm)] = acc

    # Single pass stats on the freshly computed tile (already in vregs).
    sum_ref[...] += jnp.sum(acc, axis=1, keepdims=True)
    ssq_ref[...] += jnp.sum(acc * acc, axis=1, keepdims=True)

    @pl.when(m == last)
    def _():
        mean = sum_ref[...] * inv_m                    # divide by TRUE M (padding is 0)
        var = ssq_ref[...] * inv_m - mean * mean       # biased var, like torch training BN
        scale = g_ref[...] * lax.rsqrt(var + EPS)      # (Cout, 1)
        shift = b_ref[...] - mean * scale
        y = o_ref[...] * scale + shift                 # normalize resident buffer in place
        o_ref[...] = jnp.where(y >= 0, y, NEG_SLOPE * y)


def _fused_tconv_bn_lrelu(w2d, cols, gamma, beta, true_m, tm):
    Cout, K = w2d.shape
    _, Mp = cols.shape
    kern = functools.partial(_decoder_kernel, inv_m=1.0 / float(true_m), tm=tm)
    per_ch = pl.BlockSpec((Cout, 1), lambda m: (0, 0))
    return pl.pallas_call(
        kern,
        out_shape=jax.ShapeDtypeStruct((Cout, Mp), jnp.float32),
        grid=(Mp // tm,),
        in_specs=[pl.BlockSpec((Cout, K), lambda m: (0, 0)),
                  pl.BlockSpec((K, tm), lambda m: (0, m)),
                  per_ch, per_ch],
        # Same block index for every grid step -> output stays resident in VMEM
        # (accumulator pattern); single HBM writeback at the end.
        out_specs=pl.BlockSpec((Cout, Mp), lambda m: (0, 0)),
        scratch_shapes=[pltpu.VMEM((Cout, 1), jnp.float32),
                        pltpu.VMEM((Cout, 1), jnp.float32)],
        compiler_params=pltpu.CompilerParams(
            dimension_semantics=("arbitrary",),
            vmem_limit_bytes=32 * 1024 * 1024),
    )(w2d, cols, gamma, beta)


# ------------------------------ Decoder forward --------------------------------

def decoder_forward(x, weight, bias, gamma, beta,
                    stride, padding, output_padding, *, tile_cap=2048):
    """x: (N, Cin, H, W); weight: (Cin, Cout, KH, KW) [torch ConvTranspose2d]."""
    Nb, Cin, H, W = x.shape
    _, Cout, KH, KW = weight.shape
    sh, sw = stride
    ph, pw = padding
    oph, opw = output_padding

    H_out = (H - 1) * sh - 2 * ph + KH + oph
    W_out = (W - 1) * sw - 2 * pw + KW + opw
    M = Nb * H_out * W_out

    # Bias before training-mode BatchNorm is cancelled exactly by the mean
    # subtraction -> dead work, dropped (saves a full HBM pass).
    del bias

    # ConvTranspose2d == VALID conv over the zero-dilated, zero-padded input
    # with a spatially flipped kernel. lax.pad does dilation + padding at once.
    x32 = x.astype(jnp.float32)
    x_pad = lax.pad(
        x32, jnp.float32(0.0),
        ((0, 0, 0), (0, 0, 0),
         (KH - 1 - ph, KH - 1 - ph + oph, sh - 1),
         (KW - 1 - pw, KW - 1 - pw + opw, sw - 1)))
    assert x_pad.shape[2] == H_out + KH - 1 and x_pad.shape[3] == W_out + KW - 1

    # im2col: forward slices only (no scatter-add). Rows ordered (Cin, KH, KW).
    patches = []
    for kh in range(KH):
        for kw in range(KW):
            patches.append(x_pad[:, :, kh:kh + H_out, kw:kw + W_out])
    cols = jnp.stack(patches, axis=2)                      # (N, Cin, KH*KW, Ho, Wo)
    cols = cols.transpose(1, 2, 0, 3, 4).reshape(Cin * KH * KW, M)

    # Flipped weight reshaped so Cout is on sublanes and K on the contraction.
    w_flip = weight[:, :, ::-1, ::-1].astype(jnp.float32)  # (Cin, Cout, KH, KW)
    w2d = jnp.transpose(w_flip, (1, 0, 2, 3)).reshape(Cout, Cin * KH * KW)

    # Pad M to a multiple of 128 with zero columns. Zero columns contribute 0 to
    # sum/sumsq and the divide uses the true M, so stats stay exact; padded
    # columns are sliced off after the kernel.
    Mp = ((M + 127) // 128) * 128
    if Mp != M:
        cols = jnp.pad(cols, ((0, 0), (0, Mp - M)))

    # Largest lane tile (multiple of 128) dividing Mp, capped for VMEM headroom.
    # NOTE: the resident output block is (Cout, Mp) f32 — tiny for this Decoder
    # config (Cout=4), so it always fits comfortably in VMEM.
    tm = min(Mp, tile_cap)
    while Mp % tm:
        tm -= 128

    out_cm = _fused_tconv_bn_lrelu(
        w2d, cols,
        gamma.reshape(Cout, 1).astype(jnp.float32),
        beta.reshape(Cout, 1).astype(jnp.float32),
        M, tm)                                             # (Cout, Mp)

    out_cm = out_cm[:, :M]
    # Single host-facing layout conversion back to NCHW.
    return out_cm.reshape(Cout, Nb, H_out, W_out).transpose(1, 0, 2, 3)


# ------------------------------ reference (JAX) --------------------------------

def decoder_reference(x, weight, bias, gamma, beta, stride, padding, output_padding):
    Cin, Cout, KH, KW = weight.shape
    sh, sw = stride
    ph, pw = padding
    oph, opw = output_padding
    w_flip = jnp.transpose(weight[:, :, ::-1, ::-1], (1, 0, 2, 3))  # (Cout,Cin,KH,KW)
    conv = lax.conv_general_dilated(
        x, w_flip, window_strides=(1, 1),
        padding=[(KH - 1 - ph, KH - 1 - ph + oph),
                 (KW - 1 - pw, KW - 1 - pw + opw)],
        lhs_dilation=(sh, sw),
        dimension_numbers=('NCHW', 'OIHW', 'NCHW'))
    conv = conv + bias[None, :, None, None]
    mean = jnp.mean(conv, axis=(0, 2, 3), keepdims=True)
    var = jnp.mean((conv - mean) ** 2, axis=(0, 2, 3), keepdims=True)
    xn = (conv - mean) * lax.rsqrt(var + EPS)
    yb = xn * gamma[None, :, None, None] + beta[None, :, None, None]
    return jnp.where(yb >= 0, yb, NEG_SLOPE * yb)


# ----------------------------------- main ---------------------------------------

if __name__ == "__main__":
    # Decoder(in_channels=4, out_channels=4, kernel_size=(3,3), stride=(2,2),
    #         output_padding=(1,1), padding=(1,1), complex=False,
    #         activation='LeakyReLU', type_norm='BatchNorm2d')
    Nb, Cin, H, W = 2, 4, 16, 16
    Cout, KH, KW = 4, 3, 3
    stride, padding, output_padding = (2, 2), (1, 1), (1, 1)

    key = jax.random.PRNGKey(0)
    kx, kw_, kb, kg, kbe = jax.random.split(key, 5)
    x = jax.random.normal(kx, (Nb, Cin, H, W), jnp.float32)
    weight = jax.random.normal(kw_, (Cin, Cout, KH, KW), jnp.float32) * 0.1
    bias = jax.random.normal(kb, (Cout,), jnp.float32) * 0.1
    gamma = 1.0 + 0.1 * jax.random.normal(kg, (Cout,), jnp.float32)
    beta = 0.1 * jax.random.normal(kbe, (Cout,), jnp.float32)

    out = decoder_forward(x, weight, bias, gamma, beta,
                          stride, padding, output_padding)
    out = jax.block_until_ready(out)

    ref = decoder_reference(x, weight, bias, gamma, beta,
                            stride, padding, output_padding)
    ref = jax.block_until_ready(ref)

    assert out.shape == (Nb, Cout, 32, 32), out.shape
    np.testing.assert_allclose(np.asarray(out), np.asarray(ref),
                               rtol=1e-4, atol=1e-4)
    print("KERNEL_OK")
</pallas_src>

<mosaic_0001>
module attributes {stable_mosaic.version = 11 : i64} {
  func.func @_decoder_kernel(%arg0: i32, %arg1: memref<4x36xf32, #tpu.memory_space<vmem>>, %arg2: memref<36x2048xf32, #tpu.memory_space<vmem>>, %arg3: memref<4x1xf32, #tpu.memory_space<vmem>>, %arg4: memref<4x1xf32, #tpu.memory_space<vmem>>, %arg5: memref<4x2048xf32, #tpu.memory_space<vmem>>, %arg6: memref<4x1xf32, #tpu.memory_space<vmem>>, %arg7: memref<4x1xf32, #tpu.memory_space<vmem>>) attributes {dimension_semantics = [#tpu.dimension_semantics<arbitrary>], iteration_bounds = array<i64: 1>, scalar_prefetch = 0 : i64, scratch_operands = 2 : i64, tpu.core_type = #tpu.core_type<tc>, window_params = [{pipeline_mode = #tpu.pipeline_mode<synchronous>, transform_indices = @transform_0, window_bounds = array<i64: 4, 36>}, {transform_indices = @transform_1, window_bounds = array<i64: 36, 2048>}, {pipeline_mode = #tpu.pipeline_mode<synchronous>, transform_indices = @transform_2, window_bounds = array<i64: 4, 1>}, {pipeline_mode = #tpu.pipeline_mode<synchronous>, transform_indices = @transform_3, window_bounds = array<i64: 4, 1>}, {pipeline_mode = #tpu.pipeline_mode<synchronous>, transform_indices = @transform_4, window_bounds = array<i64: 4, 2048>}]} {
    %c0_i32 = arith.constant 0 : i32
    %0 = arith.cmpi eq, %arg0, %c0_i32 : i32
    %1 = arith.extui %0 : i1 to i32
    %c0_i32_0 = arith.constant 0 : i32
    %2 = arith.cmpi ne, %1, %c0_i32_0 : i32
    scf.if %2 {
      %cst_17 = arith.constant 0.000000e+00 : f32
      %24 = vector.broadcast %cst_17 : f32 to vector<4x1xf32>
      %c0_18 = arith.constant 0 : index
      %c0_19 = arith.constant 0 : index
      %25 = vector.load %arg6[%c0_18, %c0_19] : memref<4x1xf32, #tpu.memory_space<vmem>>, vector<4x1xf32>
      tpu.vector_store %arg6[%c0_18, %c0_19], %24 {strides = array<i32>} : memref<4x1xf32, #tpu.memory_space<vmem>>, vector<4x1xf32>,
      %cst_20 = arith.constant 0.000000e+00 : f32
      %26 = vector.broadcast %cst_20 : f32 to vector<4x1xf32>
      %c0_21 = arith.constant 0 : index
      %c0_22 = arith.constant 0 : index
      %27 = vector.load %arg7[%c0_21, %c0_22] : memref<4x1xf32, #tpu.memory_space<vmem>>, vector<4x1xf32>
      tpu.vector_store %arg7[%c0_21, %c0_22], %26 {strides = array<i32>} : memref<4x1xf32, #tpu.memory_space<vmem>>, vector<4x1xf32>,
    } else {
    }
    %c0 = arith.constant 0 : index
    %c0_1 = arith.constant 0 : index
    %3 = vector.load %arg1[%c0, %c0_1] : memref<4x36xf32, #tpu.memory_space<vmem>>, vector<4x36xf32>
    %c0_2 = arith.constant 0 : index
    %c0_3 = arith.constant 0 : index
    %4 = vector.load %arg2[%c0_2, %c0_3] : memref<36x2048xf32, #tpu.memory_space<vmem>>, vector<36x2048xf32>
    %cst = arith.constant dense<0.000000e+00> : vector<4x2048xf32>
    %5 = tpu.matmul %3, %4, %cst {dimension_numbers = #tpu.dot_dimension_numbers<[1], [0], [0], [1], [0, 0, 1, 1], [], []>} : vector<4x36xf32>, vector<36x2048xf32>, vector<4x2048xf32> -> vector<4x2048xf32>
    %c2048_i32 = arith.constant 2048 : i32
    %6 = arith.muli %arg0, %c2048_i32 : i32
    %7 = tpu.assume_multiple %6, 2048 : i32
    %c0_4 = arith.constant 0 : index
    %8 = arith.index_cast %7 : i32 to index
    %9 = vector.load %arg5[%c0_4, %8] : memref<4x2048xf32, #tpu.memory_space<vmem>>, vector<4x2048xf32>
    tpu.vector_store %arg5[%c0_4, %8], %5 {strides = array<i32>} : memref<4x2048xf32, #tpu.memory_space<vmem>>, vector<4x2048xf32>,
    %c0_5 = arith.constant 0 : index
    %c0_6 = arith.constant 0 : index
    %10 = vector.load %arg6[%c0_5, %c0_6] : memref<4x1xf32, #tpu.memory_space<vmem>>, vector<4x1xf32>
    %cst_7 = arith.constant dense<0.000000e+00> : vector<4xf32>
    %11 = vector.multi_reduction <add>, %5, %cst_7 [1] : vector<4x2048xf32> to vector<4xf32>
    %12 = vector.shape_cast %11 : vector<4xf32> to vector<4x1xf32>
    %13 = arith.addf %10, %12 : vector<4x1xf32>
    %c0_8 = arith.constant 0 : index
    %c0_9 = arith.constant 0 : index
    %14 = vector.load %arg6[%c0_8, %c0_9] : memref<4x1xf32, #tpu.memory_space<vmem>>, vector<4x1xf32>
    tpu.vector_store %arg6[%c0_8, %c0_9], %13 {strides = array<i32>} : memref<4x1xf32, #tpu.memory_space<vmem>>, vector<4x1xf32>,
    %c0_10 = arith.constant 0 : index
    %c0_11 = arith.constant 0 : index
    %15 = vector.load %arg7[%c0_10, %c0_11] : memref<4x1xf32, #tpu.memory_space<vmem>>, vector<4x1xf32>
    %16 = arith.mulf %5, %5 : vector<4x2048xf32>
    %cst_12 = arith.constant dense<0.000000e+00> : vector<4xf32>
    %17 = vector.multi_reduction <add>, %16, %cst_12 [1] : vector<4x2048xf32> to vector<4xf32>
    %18 = vector.shape_cast %17 : vector<4xf32> to vector<4x1xf32>
    %19 = arith.addf %15, %18 : vector<4x1xf32>
    %c0_13 = arith.constant 0 : index
    %c0_14 = arith.constant 0 : index
    %20 = vector.load %arg7[%c0_13, %c0_14] : memref<4x1xf32, #tpu.memory_space<vmem>>, vector<4x1xf32>
    tpu.vector_store %arg7[%c0_13, %c0_14], %19 {strides = array<i32>} : memref<4x1xf32, #tpu.memory_space<vmem>>, vector<4x1xf32>,
    %c0_i32_15 = arith.constant 0 : i32
    %21 = arith.cmpi eq, %arg0, %c0_i32_15 : i32
    %22 = arith.extui %21 : i1 to i32
    %c0_i32_16 = arith.constant 0 : i32
    %23 = arith.cmpi ne, %22, %c0_i32_16 : i32
    scf.if %23 {
      %c0_17 = arith.constant 0 : index
      %c0_18 = arith.constant 0 : index
      %24 = vector.load %arg6[%c0_17, %c0_18] : memref<4x1xf32, #tpu.memory_space<vmem>>, vector<4x1xf32>
      %cst_19 = arith.constant 4.8828125E-4 : f32
      %25 = vector.broadcast %cst_19 : f32 to vector<4x1xf32>
      %26 = arith.mulf %24, %25 : vector<4x1xf32>
      %c0_20 = arith.constant 0 : index
      %c0_21 = arith.constant 0 : index
      %27 = vector.load %arg7[%c0_20, %c0_21] : memref<4x1xf32, #tpu.memory_space<vmem>>, vector<4x1xf32>
      %cst_22 = arith.constant 4.8828125E-4 : f32
      %28 = vector.broadcast %cst_22 : f32 to vector<4x1xf32>
      %29 = arith.mulf %27, %28 : vector<4x1xf32>
      %30 = arith.mulf %26, %26 : vector<4x1xf32>
      %31 = arith.subf %29, %30 : vector<4x1xf32>
      %c0_23 = arith.constant 0 : index
      %c0_24 = arith.constant 0 : index
      %32 = vector.load %arg3[%c0_23, %c0_24] : memref<4x1xf32, #tpu.memory_space<vmem>>, vector<4x1xf32>
      %cst_25 = arith.constant 9.99999974E-6 : f32
      %33 = vector.broadcast %cst_25 : f32 to vector<4x1xf32>
      %34 = arith.addf %31, %33 : vector<4x1xf32>
      %35 = math.rsqrt %34 : vector<4x1xf32>
      %36 = arith.mulf %32, %35 : vector<4x1xf32>
      %c0_26 = arith.constant 0 : index
      %c0_27 = arith.constant 0 : index
      %37 = vector.load %arg4[%c0_26, %c0_27] : memref<4x1xf32, #tpu.memory_space<vmem>>, vector<4x1xf32>
      %38 = arith.mulf %26, %36 : vector<4x1xf32>
      %39 = arith.subf %37, %38 : vector<4x1xf32>
      %c0_28 = arith.constant 0 : index
      %c0_29 = arith.constant 0 : index
      %40 = vector.load %arg5[%c0_28, %c0_29] : memref<4x2048xf32, #tpu.memory_space<vmem>>, vector<4x2048xf32>
      %41 = vector.broadcast %36 : vector<4x1xf32> to vector<4x2048xf32>
      %42 = arith.mulf %40, %41 : vector<4x2048xf32>
      %43 = vector.broadcast %39 : vector<4x1xf32> to vector<4x2048xf32>
      %44 = arith.addf %42, %43 : vector<4x2048xf32>
      %cst_30 = arith.constant 0.000000e+00 : f32
      %45 = vector.broadcast %cst_30 : f32 to vector<4x2048xf32>
      %46 = arith.cmpf oge, %44, %45 : vector<4x2048xf32>
      %cst_31 = arith.constant 0.00999999977 : f32
      %47 = vector.broadcast %cst_31 : f32 to vector<4x2048xf32>
      %48 = arith.mulf %47, %44 : vector<4x2048xf32>
      %49 = arith.select %46, %44, %48 : vector<4x2048xi1>, vector<4x2048xf32>
      %c0_32 = arith.constant 0 : index
      %c0_33 = arith.constant 0 : index
      %50 = vector.load %arg5[%c0_32, %c0_33] : memref<4x2048xf32, #tpu.memory_space<vmem>>, vector<4x2048xf32>
      tpu.vector_store %arg5[%c0_32, %c0_33], %49 {strides = array<i32>} : memref<4x2048xf32, #tpu.memory_space<vmem>>, vector<4x2048xf32>,
    } else {
    }
    return
  }
  func.func @transform_0(%arg0: i32) -> (i32, i32) {
    %c0_i32 = arith.constant 0 : i32
    %c0_i32_0 = arith.constant 0 : i32
    %c0_i32_1 = arith.constant 0 : i32
    return %c0_i32, %c0_i32_0 : i32, i32
  }
  func.func @transform_1(%arg0: i32) -> (i32, i32) {
    %c0_i32 = arith.constant 0 : i32
    %c0_i32_0 = arith.constant 0 : i32
    return %c0_i32, %arg0 : i32, i32
  }
  func.func @transform_2(%arg0: i32) -> (i32, i32) {
    %c0_i32 = arith.constant 0 : i32
    %c0_i32_0 = arith.constant 0 : i32
    %c0_i32_1 = arith.constant 0 : i32
    return %c0_i32, %c0_i32_0 : i32, i32
  }
  func.func @transform_3(%arg0: i32) -> (i32, i32) {
    %c0_i32 = arith.constant 0 : i32
    %c0_i32_0 = arith.constant 0 : i32
    %c0_i32_1 = arith.constant 0 : i32
    return %c0_i32, %c0_i32_0 : i32, i32
  }
  func.func @transform_4(%arg0: i32) -> (i32, i32) {
    %c0_i32 = arith.constant 0 : i32
    %c0_i32_0 = arith.constant 0 : i32
    %c0_i32_1 = arith.constant 0 : i32
    return %c0_i32, %c0_i32_0 : i32, i32
  }
}

</mosaic_0001>

<llo_original>
// kernel: tpu_custom_call.1
$region0: #{tpu_custom_call.1}
  #allocation0 [shape = 'u32[]', space=smem, size = 0x4, offset = 0x4, fixed_abs, tag = 'smem constant byte address 0x4 - core index']
  #allocation1 [shape = 'u32[144,128]{1,0:T(1,128)}', space=vmem, size = 0x12000, scoped, tag = 'internal scratch']
  #allocation2 [shape = 'f32[4,1]{1,0:T(4,128)}', space=vmem, size = 0x800, scoped, tag = 'scratch operand']
  #allocation3 [shape = 'f32[4,1]{1,0:T(4,128)}', space=vmem, size = 0x800, scoped, tag = 'scratch operand']
  %s0 = inlined_call_operand.vmem [shape: f32[4,36], index: 0, kind: input, shape index: {}]
  %s1 = inlined_call_operand.hbm [shape: f32[36,2048], index: 1, kind: input, shape index: {}]
  %s2 = inlined_call_operand.vmem [shape: f32[4,1], index: 2, kind: input, shape index: {}]
  %s3 = inlined_call_operand.vmem [shape: f32[4,1], index: 3, kind: input, shape index: {}]
  %s4 = inlined_call_operand.hbm [shape: f32[4,2048], index: 4, kind: output, shape index: {}]
  %s5 = sld [smem:[#allocation0]]
  $region38: #{tpu_custom_call.1} parent=0
    _
  %s7 = ssub.s32 1, %s5
  %s8 = scalar_select 0, %s7, %s5
  $region1: #{tpu_custom_call.1} parent=0
    #allocation4 [shape = 'u8[327680]{0}', space=vmem, size = 0x50000, scoped, tag = 'input window, operand 1, single buffered']
    #allocation5 [shape = 's32[1]{0}', space=sflag, size = 0x4, scoped, tag = 'scoped memory for tpu_custom_call.1']
    #allocation6 [shape = 's32[1]{0}', space=sflag, size = 0x4, scoped, tag = 'scoped memory for tpu_custom_call.1']
    #allocation7 [shape = 'u8[32768]{0}', space=vmem, size = 0x8000, scoped, tag = 'output window, operand 0, single buffered']
    %9 = vsyncpa [#allocation5], 0
    %10 = vsyncpa [#allocation6], 0
    // Predicated region
    $region2: #{tpu_custom_call.1} parent=1 // pred_check
      _
    $region3: #{tpu_custom_call.1} parent=1 // pred_check_branch
      %12 = sbr.rel (0) target = $region5
    $region4: #{tpu_custom_call.1} parent=1 // pred_region
      _
    $region5: #{tpu_custom_call.1} parent=1 // pred_fallthru
      _
    // Predicated region
    $region6: #{tpu_custom_call.1} parent=1 // pred_check
      _
    $region7: #{tpu_custom_call.1} parent=1 // pred_check_branch
      %14 = sbr.rel (0) target = $region9
    $region8: #{tpu_custom_call.1} parent=1 // pred_region
      %s16 = ssub.s32 10240, 10240
      %17 = vsyncadd [#allocation5], %s16
      %s18 = sshll.u32 [#allocation4], 4
      %s19 = int_to_ptr.vmem [resolvable:$true] %s18
      %24 = dma.hbm_to_vmem [thread:$0]  %s1, 10240, %s19, [#allocation5], 2048, 2048, 128
    $region9: #{tpu_custom_call.1} parent=1 // pred_fallthru
      _
    // Predicated region
    $region10: #{tpu_custom_call.1} parent=1 // pred_check
      _
    $region11: #{tpu_custom_call.1} parent=1 // pred_check_branch
      %26 = sbr.rel (0) target = $region13
    $region12: #{tpu_custom_call.1} parent=1 // pred_region
      _
    $region13: #{tpu_custom_call.1} parent=1 // pred_fallthru
      _
    // Predicated region
    $region14: #{tpu_custom_call.1} parent=1 // pred_check
      _
    $region15: #{tpu_custom_call.1} parent=1 // pred_check_branch
      %28 = sbr.rel (0) target = $region17
    $region16: #{tpu_custom_call.1} parent=1 // pred_region
      _
    $region17: #{tpu_custom_call.1} parent=1 // pred_fallthru
      _
    // Predicated region
    $region18: #{tpu_custom_call.1} parent=1 // pred_check
      _
    $region19: #{tpu_custom_call.1} parent=1 // pred_check_branch
      %30 = sbr.rel (0) target = $region21
    $region20: #{tpu_custom_call.1} parent=1 // pred_region
      %31 = dma.done [#allocation5], 10240
    $region21: #{tpu_custom_call.1} parent=1 // pred_fallthru
      _
    %p32 = scmp.eq.s32.totalorder 0, 0
    // Predicated region
    $region22: #{tpu_custom_call.1} parent=1 // pred_check
      %p33 = pneg %p32
    $region23: #{tpu_custom_call.1} parent=1 // pred_check_branch
      %35 = sbr.rel (%p33) target = $region25
    $region24: #{tpu_custom_call.1} parent=1 // pred_region
      %vm36 = vcmask 3072
      %37 = vst.msk [vmem:[#allocation2] sm:$0xf] %vm36, 0.0
      %38 = vst.msk [vmem:[#allocation3] sm:$0xf] %vm36, 0.0
    $region25: #{tpu_custom_call.1} parent=1 // pred_fallthru
      _
    %v39 = vld [vmem:[%s0] sm:$0xf]
    %v40 = vld [vmem:[#allocation4] sm:$0xff]
    %v41 = vld [vmem:[#allocation4 + $0x8] sm:$0xff]
    %v42 = vld [vmem:[#allocation4 + $0x10] sm:$0xff]
    %v43 = vld [vmem:[#allocation4 + $0x18] sm:$0xff]
    %v44 = vld [vmem:[#allocation4 + $0x20] sm:$0xff]
    %v45 = vld [vmem:[#allocation4 + $0x28] sm:$0xff]
    %v46 = vld [vmem:[#allocation4 + $0x30] sm:$0xff]
    %v47 = vld [vmem:[#allocation4 + $0x38] sm:$0xff]
    %v48 = vld [vmem:[#allocation4 + $0x40] sm:$0xff]
    %v49 = vld [vmem:[#allocation4 + $0x48] sm:$0xff]
    %v50 = vld [vmem:[#allocation4 + $0x50] sm:$0xff]
    %v51 = vld [vmem:[#allocation4 + $0x58] sm:$0xff]
    %v52 = vld [vmem:[#allocation4 + $0x60] sm:$0xff]
    %v53 = vld [vmem:[#allocation4 + $0x68] sm:$0xff]
    %v54 = vld [vmem:[#allocation4 + $0x70] sm:$0xff]
    %v55 = vld [vmem:[#allocation4 + $0x78] sm:$0xff]
    %v56 = vld [vmem:[#allocation4 + $0x80] sm:$0xff]
    %v57 = vld [vmem:[#allocation4 + $0x88] sm:$0xff]
    %v58 = vld [vmem:[#allocation4 + $0x90] sm:$0xff]
    %v59 = vld [vmem:[#allocation4 + $0x98] sm:$0xff]
    %v60 = vld [vmem:[#allocation4 + $0xa0] sm:$0xff]
    %v61 = vld [vmem:[#allocation4 + $0xa8] sm:$0xff]
    %v62 = vld [vmem:[#allocation4 + $0xb0] sm:$0xff]
    %v63 = vld [vmem:[#allocation4 + $0xb8] sm:$0xff]
    %v64 = vld [vmem:[#allocation4 + $0xc0] sm:$0xff]
    %v65 = vld [vmem:[#allocation4 + $0xc8] sm:$0xff]
    %v66 = vld [vmem:[#allocation4 + $0xd0] sm:$0xff]
    %v67 = vld [vmem:[#allocation4 + $0xd8] sm:$0xff]
    %v68 = vld [vmem:[#allocation4 + $0xe0] sm:$0xff]
    %v69 = vld [vmem:[#allocation4 + $0xe8] sm:$0xff]
    %v70 = vld [vmem:[#allocation4 + $0xf0] sm:$0xff]
    %v71 = vld [vmem:[#allocation4 + $0xf8] sm:$0xff]
    %v72 = vld [vmem:[#allocation4 + $0x100] sm:$0xff]
    %v73 = vld [vmem:[#allocation4 + $0x108] sm:$0xff]
    %v74 = vld [vmem:[#allocation4 + $0x110] sm:$0xff]
    %v75 = vld [vmem:[#allocation4 + $0x118] sm:$0xff]
    %v76 = vld [vmem:[#allocation4 + $0x120] sm:$0xff]
    %v77 = vld [vmem:[#allocation4 + $0x128] sm:$0xff]
    %v78 = vld [vmem:[#allocation4 + $0x130] sm:$0xff]
    %v79 = vld [vmem:[#allocation4 + $0x138] sm:$0xff]
    %v80 = vld [vmem:[#allocation4 + $0x140] sm:$0xff]
    %v81 = vld [vmem:[#allocation4 + $0x148] sm:$0xff]
    %v82 = vld [vmem:[#allocation4 + $0x150] sm:$0xff]
    %v83 = vld [vmem:[#allocation4 + $0x158] sm:$0xff]
    %v84 = vld [vmem:[#allocation4 + $0x160] sm:$0xff]
    %v85 = vld [vmem:[#allocation4 + $0x168] sm:$0xff]
    %v86 = vld [vmem:[#allocation4 + $0x170] sm:$0xff]
    %v87 = vld [vmem:[#allocation4 + $0x178] sm:$0xff]
    %v88 = vld [vmem:[#allocation4 + $0x180] sm:$0xff]
    %v89 = vld [vmem:[#allocation4 + $0x188] sm:$0xff]
    %v90 = vld [vmem:[#allocation4 + $0x190] sm:$0xff]
    %v91 = vld [vmem:[#allocation4 + $0x198] sm:$0xff]
    %v92 = vld [vmem:[#allocation4 + $0x1a0] sm:$0xff]
    %v93 = vld [vmem:[#allocation4 + $0x1a8] sm:$0xff]
    %v94 = vld [vmem:[#allocation4 + $0x1b0] sm:$0xff]
    %v95 = vld [vmem:[#allocation4 + $0x1b8] sm:$0xff]
    %v96 = vld [vmem:[#allocation4 + $0x1c0] sm:$0xff]
    %v97 = vld [vmem:[#allocation4 + $0x1c8] sm:$0xff]
    %v98 = vld [vmem:[#allocation4 + $0x1d0] sm:$0xff]
    %v99 = vld [vmem:[#allocation4 + $0x1d8] sm:$0xff]
    %v100 = vld [vmem:[#allocation4 + $0x1e0] sm:$0xff]
    %v101 = vld [vmem:[#allocation4 + $0x1e8] sm:$0xff]
    %v102 = vld [vmem:[#allocation4 + $0x1f0] sm:$0xff]
    %v103 = vld [vmem:[#allocation4 + $0x1f8] sm:$0xff]
    %v104 = vld [vmem:[#allocation4 + $0x200] sm:$0xf]
    %v105 = vld [vmem:[#allocation4 + $0x208] sm:$0xf]
    %v106 = vld [vmem:[#allocation4 + $0x210] sm:$0xf]
    %v107 = vld [vmem:[#allocation4 + $0x218] sm:$0xf]
    %v108 = vld [vmem:[#allocation4 + $0x220] sm:$0xf]
    %v109 = vld [vmem:[#allocation4 + $0x228] sm:$0xf]
    %v110 = vld [vmem:[#allocation4 + $0x230] sm:$0xf]
    %v111 = vld [vmem:[#allocation4 + $0x238] sm:$0xf]
    %v112 = vld [vmem:[#allocation4 + $0x240] sm:$0xf]
    %v113 = vld [vmem:[#allocation4 + $0x248] sm:$0xf]
    %v114 = vld [vmem:[#allocation4 + $0x250] sm:$0xf]
    %v115 = vld [vmem:[#allocation4 + $0x258] sm:$0xf]
    %v116 = vld [vmem:[#allocation4 + $0x260] sm:$0xf]
    %v117 = vld [vmem:[#allocation4 + $0x268] sm:$0xf]
    %v118 = vld [vmem:[#allocation4 + $0x270] sm:$0xf]
    %v119 = vld [vmem:[#allocation4 + $0x278] sm:$0xf]
    %vm120 = vcmask 293888
    %v122 = vsel %vm120, %v39, 0
    %vm124 = vcmask 1043456
    %v126 = vsel %vm124, %v104, 0
    %v129 = vsel %vm124, %v105, 0
    %v132 = vsel %vm124, %v106, 0
    %v135 = vsel %vm124, %v107, 0
    %v138 = vsel %vm124, %v108, 0
    %v141 = vsel %vm124, %v109, 0
    %v144 = vsel %vm124, %v110, 0
    %v147 = vsel %vm124, %v111, 0
    %v150 = vsel %vm124, %v112, 0
    %v153 = vsel %vm124, %v113, 0
    %v156 = vsel %vm124, %v114, 0
    %v159 = vsel %vm124, %v115, 0
    %v162 = vsel %vm124, %v116, 0
    %v165 = vsel %vm124, %v117, 0
    %v168 = vsel %vm124, %v118, 0
    %v171 = vsel %vm124, %v119, 0
    %173 = vmatprep.subr.mxu0 %v41
    %174 = vmatpush1.msra.mxu0 %v40
    %175 = vmatprep.subr.mxu0 %v57
    %176 = vmatpush1.msra.mxu0 %v56
    %177 = vmatprep.subr.mxu0 %v73
    %178 = vmatpush1.msra.mxu0 %v72
    %179 = vmatprep.subr.mxu0 %v89
    %180 = vmatpush1.msra.mxu0 %v88
    %181 = vmatprep.subr.mxu0 %v129
    %182 = vmatpush1.msra.mxu0 %v126
    %183 = vmatprep.subr.mxu0 0.0
    %184 = vmatpush1.msra.mxu0 0.0
    %185 = vmatprep.subr.mxu0 0.0
    %186 = vmatpush1.msra.mxu0 0.0
    %187 = vmatprep.subr.mxu0 0.0
    %188 = vmatpush1.msra.mxu0 0.0
    %189 = vmatprep.subr.mxu0 0.0
    %190 = vmatpush1.msra.mxu0 0.0
    %191 = vmatprep.subr.mxu0 0.0
    %192 = vmatpush1.msra.mxu0 0.0
    %193 = vmatprep.subr.mxu0 0.0
    %194 = vmatpush1.msra.mxu0 0.0
    %195 = vmatprep.subr.mxu0 0.0
    %196 = vmatpush1.msra.mxu0 0.0
    %197 = vmatprep.subr.mxu0 0.0
    %198 = vmatpush1.msra.mxu0 0.0
    %199 = vmatprep.subr.mxu0 0.0
    %200 = vmatpush1.msra.mxu0 0.0
    %201 = vmatprep.subr.mxu0 0.0
    %202 = vmatpush1.msra.mxu0 0.0
    %203 = vmatprep.subr.mxu0 0.0
    %204 = vmatpush1.msra.mxu0 0.0
    %205 = vmatprep.subr.mxu0 0.0
    %206 = vmatpush1.msra.mxu0 0.0
    %207 = vmatprep.subr.mxu0 0.0
    %208 = vmatpush1.msra.mxu0 0.0
    %209 = vmatprep.subr.mxu0 0.0
    %210 = vmatpush1.msra.mxu0 0.0
    %211 = vmatprep.subr.mxu0 0.0
    %212 = vmatpush1.msra.mxu0 0.0
    %213 = vmatprep.subr.mxu0 0.0
    %214 = vmatpush1.msra.mxu0 0.0
    %215 = vmatprep.subr.mxu0 0.0
    %216 = vmatpush1.msra.mxu0 0.0
    %217 = vmatprep.subr.mxu0 0.0
    %218 = vmatpush1.msra.mxu0 0.0
    %219 = vmatprep.subr.mxu0 0.0
    %220 = vmatpush1.msra.mxu0 0.0
    %221 = vmatprep.subr.mxu0 0.0
    %222 = vmatpush1.msra.mxu0 0.0
    %223 = vmatprep.subr.mxu0 0.0
    %224 = vmatpush1.msra.mxu0 0.0
    %225 = vmatprep.subr.mxu0 0.0
    %226 = vmatpush1.msra.mxu0 0.0
    %227 = vmatprep.subr.mxu0 0.0
    %228 = vmatpush1.msra.mxu0 0.0
    %229 = vmatprep.subr.mxu0 0.0
    %230 = vmatpush1.msra.mxu0 0.0
    %231 = vmatprep.subr.mxu0 0.0
    %232 = vmatpush1.msra.mxu0 0.0
    %233 = vmatprep.subr.mxu0 0.0
    %234 = vmatpush1.msra.mxu0 0.0
    %235 = vmatprep.subr.mxu0 0.0
    %236 = vmatpush1.msra.mxu0 0.0
    %237 = vmatprep.mubr.f32.mxu0 0.0
    %238 = vmatmul.mubr.f32.gmra.mrb[0].mxu0 %v122
    %v239 = vpop.f32.mrb[0].mxu0
    %v240 = vadd.f32 0.0, %v239
    %v241 = vpop.f32.mrb[0].mxu0
    %v242 = vadd.f32 0.0, %v241
    %243 = vdwg.mxu0
    %244 = vmatprep.subr.mxu0 %v43
    %245 = vmatpush1.msra.mxu0 %v42
    %246 = vmatprep.subr.mxu0 %v59
    %247 = vmatpush1.msra.mxu0 %v58
    %248 = vmatprep.subr.mxu0 %v75
    %249 = vmatpush1.msra.mxu0 %v74
    %250 = vmatprep.subr.mxu0 %v91
    %251 = vmatpush1.msra.mxu0 %v90
    %252 = vmatprep.subr.mxu0 %v135
    %253 = vmatpush1.msra.mxu0 %v132
    %254 = vmatprep.subr.mxu0 0.0
    %255 = vmatpush1.msra.mxu0 0.0
    %256 = vmatprep.subr.mxu0 0.0
    %257 = vmatpush1.msra.mxu0 0.0
    %258 = vmatprep.subr.mxu0 0.0
    %259 = vmatpush1.msra.mxu0 0.0
    %260 = vmatprep.subr.mxu0 0.0
    %261 = vmatpush1.msra.mxu0 0.0
    %262 = vmatprep.subr.mxu0 0.0
    %263 = vmatpush1.msra.mxu0 0.0
    %264 = vmatprep.subr.mxu0 0.0
    %265 = vmatpush1.msra.mxu0 0.0
    %266 = vmatprep.subr.mxu0 0.0
    %267 = vmatpush1.msra.mxu0 0.0
    %268 = vmatprep.subr.mxu0 0.0
    %269 = vmatpush1.msra.mxu0 0.0
    %270 = vmatprep.subr.mxu0 0.0
    %271 = vmatpush1.msra.mxu0 0.0
    %272 = vmatprep.subr.mxu0 0.0
    %273 = vmatpush1.msra.mxu0 0.0
    %274 = vmatprep.subr.mxu0 0.0
    %275 = vmatpush1.msra.mxu0 0.0
    %276 = vmatprep.subr.mxu0 0.0
    %277 = vmatpush1.msra.mxu0 0.0
    %278 = vmatprep.subr.mxu0 0.0
    %279 = vmatpush1.msra.mxu0 0.0
    %280 = vmatprep.subr.mxu0 0.0
    %281 = vmatpush1.msra.mxu0 0.0
    %282 = vmatprep.subr.mxu0 0.0
    %283 = vmatpush1.msra.mxu0 0.0
    %284 = vmatprep.subr.mxu0 0.0
    %285 = vmatpush1.msra.mxu0 0.0
    %286 = vmatprep.subr.mxu0 0.0
    %287 = vmatpush1.msra.mxu0 0.0
    %288 = vmatprep.subr.mxu0 0.0
    %289 = vmatpush1.msra.mxu0 0.0
    %290 = vmatprep.subr.mxu0 0.0
    %291 = vmatpush1.msra.mxu0 0.0
    %292 = vmatprep.subr.mxu0 0.0
    %293 = vmatpush1.msra.mxu0 0.0
    %294 = vmatprep.subr.mxu0 0.0
    %295 = vmatpush1.msra.mxu0 0.0
    %296 = vmatprep.subr.mxu0 0.0
    %297 = vmatpush1.msra.mxu0 0.0
    %298 = vmatprep.subr.mxu0 0.0
    %299 = vmatpush1.msra.mxu0 0.0
    %300 = vmatprep.subr.mxu0 0.0
    %301 = vmatpush1.msra.mxu0 0.0
    %302 = vmatprep.subr.mxu0 0.0
    %303 = vmatpush1.msra.mxu0 0.0
    %304 = vmatprep.subr.mxu0 0.0
    %305 = vmatpush1.msra.mxu0 0.0
    %306 = vmatprep.subr.mxu0 0.0
    %307 = vmatpush1.msra.mxu0 0.0
    %308 = vmatprep.mubr.f32.mxu0 0.0
    %309 = vmatmul.mubr.f32.gmra.mrb[0].mxu0 %v122
    %v310 = vpop.f32.mrb[0].mxu0
    %v311 = vadd.f32 0.0, %v310
    %v312 = vpop.f32.mrb[0].mxu0
    %v313 = vadd.f32 0.0, %v312
    %314 = vdwg.mxu0
    %315 = vmatprep.subr.mxu0 %v45
    %316 = vmatpush1.msra.mxu0 %v44
    %317 = vmatprep.subr.mxu0 %v61
    %318 = vmatpush1.msra.mxu0 %v60
    %319 = vmatprep.subr.mxu0 %v77
    %320 = vmatpush1.msra.mxu0 %v76
    %321 = vmatprep.subr.mxu0 %v93
    %322 = vmatpush1.msra.mxu0 %v92
    %323 = vmatprep.subr.mxu0 %v141
    %324 = vmatpush1.msra.mxu0 %v138
    %325 = vmatprep.subr.mxu0 0.0
    %326 = vmatpush1.msra.mxu0 0.0
    %327 = vmatprep.subr.mxu0 0.0
    %328 = vmatpush1.msra.mxu0 0.0
    %329 = vmatprep.subr.mxu0 0.0
    %330 = vmatpush1.msra.mxu0 0.0
    %331 = vmatprep.subr.mxu0 0.0
    %332 = vmatpush1.msra.mxu0 0.0
    %333 = vmatprep.subr.mxu0 0.0
    %334 = vmatpush1.msra.mxu0 0.0
    %335 = vmatprep.subr.mxu0 0.0
    %336 = vmatpush1.msra.mxu0 0.0
    %337 = vmatprep.subr.mxu0 0.0
    %338 = vmatpush1.msra.mxu0 0.0
    %339 = vmatprep.subr.mxu0 0.0
    %340 = vmatpush1.msra.mxu0 0.0
    %341 = vmatprep.subr.mxu0 0.0
    %342 = vmatpush1.msra.mxu0 0.0
    %343 = vmatprep.subr.mxu0 0.0
    %344 = vmatpush1.msra.mxu0 0.0
    %345 = vmatprep.subr.mxu0 0.0
    %346 = vmatpush1.msra.mxu0 0.0
    %347 = vmatprep.subr.mxu0 0.0
    %348 = vmatpush1.msra.mxu0 0.0
    %349 = vmatprep.subr.mxu0 0.0
    %350 = vmatpush1.msra.mxu0 0.0
    %351 = vmatprep.subr.mxu0 0.0
    %352 = vmatpush1.msra.mxu0 0.0
    %353 = vmatprep.subr.mxu0 0.0
    %354 = vmatpush1.msra.mxu0 0.0
    %355 = vmatprep.subr.mxu0 0.0
    %356 = vmatpush1.msra.mxu0 0.0
    %357 = vmatprep.subr.mxu0 0.0
    %358 = vmatpush1.msra.mxu0 0.0
    %359 = vmatprep.subr.mxu0 0.0
    %360 = vmatpush1.msra.mxu0 0.0
    %361 = vmatprep.subr.mxu0 0.0
    %362 = vmatpush1.msra.mxu0 0.0
    %363 = vmatprep.subr.mxu0 0.0
    %364 = vmatpush1.msra.mxu0 0.0
    %365 = vmatprep.subr.mxu0 0.0
    %366 = vmatpush1.msra.mxu0 0.0
    %367 = vmatprep.subr.mxu0 0.0
    %368 = vmatpush1.msra.mxu0 0.0
    %369 = vmatprep.subr.mxu0 0.0
    %370 = vmatpush1.msra.mxu0 0.0
    %371 = vmatprep.subr.mxu0 0.0
    %372 = vmatpush1.msra.mxu0 0.0
    %373 = vmatprep.subr.mxu0 0.0
    %374 = vmatpush1.msra.mxu0 0.0
    %375 = vmatprep.subr.mxu0 0.0
    %376 = vmatpush1.msra.mxu0 0.0
    %377 = vmatprep.subr.mxu0 0.0
    %378 = vmatpush1.msra.mxu0 0.0
    %379 = vmatprep.mubr.f32.mxu0 0.0
    %380 = vmatmul.mubr.f32.gmra.mrb[0].mxu0 %v122
    %v381 = vpop.f32.mrb[0].mxu0
    %v382 = vadd.f32 0.0, %v381
    %v383 = vpop.f32.mrb[0].mxu0
    %v384 = vadd.f32 0.0, %v383
    %385 = vdwg.mxu0
    %386 = vmatprep.subr.mxu0 %v47
    %387 = vmatpush1.msra.mxu0 %v46
    %388 = vmatprep.subr.mxu0 %v63
    %389 = vmatpush1.msra.mxu0 %v62
    %390 = vmatprep.subr.mxu0 %v79
    %391 = vmatpush1.msra.mxu0 %v78
    %392 = vmatprep.subr.mxu0 %v95
    %393 = vmatpush1.msra.mxu0 %v94
    %394 = vmatprep.subr.mxu0 %v147
    %395 = vmatpush1.msra.mxu0 %v144
    %396 = vmatprep.subr.mxu0 0.0
    %397 = vmatpush1.msra.mxu0 0.0
    %398 = vmatprep.subr.mxu0 0.0
    %399 = vmatpush1.msra.mxu0 0.0
    %400 = vmatprep.subr.mxu0 0.0
    %401 = vmatpush1.msra.mxu0 0.0
    %402 = vmatprep.subr.mxu0 0.0
    %403 = vmatpush1.msra.mxu0 0.0
    %404 = vmatprep.subr.mxu0 0.0
    %405 = vmatpush1.msra.mxu0 0.0
    %406 = vmatprep.subr.mxu0 0.0
    %407 = vmatpush1.msra.mxu0 0.0
    %408 = vmatprep.subr.mxu0 0.0
    %409 = vmatpush1.msra.mxu0 0.0
    %410 = vmatprep.subr.mxu0 0.0
    %411 = vmatpush1.msra.mxu0 0.0
    %412 = vmatprep.subr.mxu0 0.0
    %413 = vmatpush1.msra.mxu0 0.0
    %414 = vmatprep.subr.mxu0 0.0
    %415 = vmatpush1.msra.mxu0 0.0
    %416 = vmatprep.subr.mxu0 0.0
    %417 = vmatpush1.msra.mxu0 0.0
    %418 = vmatprep.subr.mxu0 0.0
    %419 = vmatpush1.msra.mxu0 0.0
    %420 = vmatprep.subr.mxu0 0.0
    %421 = vmatpush1.msra.mxu0 0.0
    %422 = vmatprep.subr.mxu0 0.0
    %423 = vmatpush1.msra.mxu0 0.0
    %424 = vmatprep.subr.mxu0 0.0
    %425 = vmatpush1.msra.mxu0 0.0
    %426 = vmatprep.subr.mxu0 0.0
    %427 = vmatpush1.msra.mxu0 0.0
    %428 = vmatprep.subr.mxu0 0.0
    %429 = vmatpush1.msra.mxu0 0.0
    %430 = vmatprep.subr.mxu0 0.0
    %431 = vmatpush1.msra.mxu0 0.0
    %432 = vmatprep.subr.mxu0 0.0
    %433 = vmatpush1.msra.mxu0 0.0
    %434 = vmatprep.subr.mxu0 0.0
    %435 = vmatpush1.msra.mxu0 0.0
    %436 = vmatprep.subr.mxu0 0.0
    %437 = vmatpush1.msra.mxu0 0.0
    %438 = vmatprep.subr.mxu0 0.0
    %439 = vmatpush1.msra.mxu0 0.0
    %440 = vmatprep.subr.mxu0 0.0
    %441 = vmatpush1.msra.mxu0 0.0
    %442 = vmatprep.subr.mxu0 0.0
    %443 = vmatpush1.msra.mxu0 0.0
    %444 = vmatprep.subr.mxu0 0.0
    %445 = vmatpush1.msra.mxu0 0.0
    %446 = vmatprep.subr.mxu0 0.0
    %447 = vmatpush1.msra.mxu0 0.0
    %448 = vmatprep.subr.mxu0 0.0
    %449 = vmatpush1.msra.mxu0 0.0
    %450 = vmatprep.mubr.f32.mxu0 0.0
    %451 = vmatmul.mubr.f32.gmra.mrb[0].mxu0 %v122
    %v452 = vpop.f32.mrb[0].mxu0
    %v453 = vadd.f32 0.0, %v452
    %v454 = vpop.f32.mrb[0].mxu0
    %v455 = vadd.f32 0.0, %v454
    %456 = vdwg.mxu0
    %457 = vmatprep.subr.mxu0 %v49
    %458 = vmatpush1.msra.mxu0 %v48
    %459 = vmatprep.subr.mxu0 %v65
    %460 = vmatpush1.msra.mxu0 %v64
    %461 = vmatprep.subr.mxu0 %v81
    %462 = vmatpush1.msra.mxu0 %v80
    %463 = vmatprep.subr.mxu0 %v97
    %464 = vmatpush1.msra.mxu0 %v96
    %465 = vmatprep.subr.mxu0 %v153
    %466 = vmatpush1.msra.mxu0 %v150
    %467 = vmatprep.subr.mxu0 0.0
    %468 = vmatpush1.msra.mxu0 0.0
    %469 = vmatprep.subr.mxu0 0.0
    %470 = vmatpush1.msra.mxu0 0.0
    %471 = vmatprep.subr.mxu0 0.0
    %472 = vmatpush1.msra.mxu0 0.0
    %473 = vmatprep.subr.mxu0 0.0
    %474 = vmatpush1.msra.mxu0 0.0
    %475 = vmatprep.subr.mxu0 0.0
    %476 = vmatpush1.msra.mxu0 0.0
    %477 = vmatprep.subr.mxu0 0.0
    %478 = vmatpush1.msra.mxu0 0.0
    %479 = vmatprep.subr.mxu0 0.0
    %480 = vmatpush1.msra.mxu0 0.0
    %481 = vmatprep.subr.mxu0 0.0
    %482 = vmatpush1.msra.mxu0 0.0
    %483 = vmatprep.subr.mxu0 0.0
    %484 = vmatpush1.msra.mxu0 0.0
    %485 = vmatprep.subr.mxu0 0.0
    %486 = vmatpush1.msra.mxu0 0.0
    %487 = vmatprep.subr.mxu0 0.0
    %488 = vmatpush1.msra.mxu0 0.0
    %489 = vmatprep.subr.mxu0 0.0
    %490 = vmatpush1.msra.mxu0 0.0
    %491 = vmatprep.subr.mxu0 0.0
    %492 = vmatpush1.msra.mxu0 0.0
    %493 = vmatprep.subr.mxu0 0.0
    %494 = vmatpush1.msra.mxu0 0.0
    %495 = vmatprep.subr.mxu0 0.0
    %496 = vmatpush1.msra.mxu0 0.0
    %497 = vmatprep.subr.mxu0 0.0
    %498 = vmatpush1.msra.mxu0 0.0
    %499 = vmatprep.subr.mxu0 0.0
    %500 = vmatpush1.msra.mxu0 0.0
    %501 = vmatprep.subr.mxu0 0.0
    %502 = vmatpush1.msra.mxu0 0.0
    %503 = vmatprep.subr.mxu0 0.0
    %504 = vmatpush1.msra.mxu0 0.0
    %505 = vmatprep.subr.mxu0 0.0
    %506 = vmatpush1.msra.mxu0 0.0
    %507 = vmatprep.subr.mxu0 0.0
    %508 = vmatpush1.msra.mxu0 0.0
    %509 = vmatprep.subr.mxu0 0.0
    %510 = vmatpush1.msra.mxu0 0.0
    %511 = vmatprep.subr.mxu0 0.0
    %512 = vmatpush1.msra.mxu0 0.0
    %513 = vmatprep.subr.mxu0 0.0
    %514 = vmatpush1.msra.mxu0 0.0
    %515 = vmatprep.subr.mxu0 0.0
    %516 = vmatpush1.msra.mxu0 0.0
    %517 = vmatprep.subr.mxu0 0.0
    %518 = vmatpush1.msra.mxu0 0.0
    %519 = vmatprep.subr.mxu0 0.0
    %520 = vmatpush1.msra.mxu0 0.0
    %521 = vmatprep.mubr.f32.mxu0 0.0
    %522 = vmatmul.mubr.f32.gmra.mrb[0].mxu0 %v122
    %v523 = vpop.f32.mrb[0].mxu0
    %v524 = vadd.f32 0.0, %v523
    %v525 = vpop.f32.mrb[0].mxu0
    %v526 = vadd.f32 0.0, %v525
    %527 = vdwg.mxu0
    %528 = vmatprep.subr.mxu0 %v51
    %529 = vmatpush1.msra.mxu0 %v50
    %530 = vmatprep.subr.mxu0 %v67
    %531 = vmatpush1.msra.mxu0 %v66
    %532 = vmatprep.subr.mxu0 %v83
    %533 = vmatpush1.msra.mxu0 %v82
    %534 = vmatprep.subr.mxu0 %v99
    %535 = vmatpush1.msra.mxu0 %v98
    %536 = vmatprep.subr.mxu0 %v159
    %537 = vmatpush1.msra.mxu0 %v156
    %538 = vmatprep.subr.mxu0 0.0
    %539 = vmatpush1.msra.mxu0 0.0
    %540 = vmatprep.subr.mxu0 0.0
    %541 = vmatpush1.msra.mxu0 0.0
    %542 = vmatprep.subr.mxu0 0.0
    %543 = vmatpush1.msra.mxu0 0.0
    %544 = vmatprep.subr.mxu0 0.0
    %545 = vmatpush1.msra.mxu0 0.0
    %546 = vmatprep.subr.mxu0 0.0
    %547 = vmatpush1.msra.mxu0 0.0
    %548 = vmatprep.subr.mxu0 0.0
    %549 = vmatpush1.msra.mxu0 0.0
    %550 = vmatprep.subr.mxu0 0.0
    %551 = vmatpush1.msra.mxu0 0.0
    %552 = vmatprep.subr.mxu0 0.0
    %553 = vmatpush1.msra.mxu0 0.0
    %554 = vmatprep.subr.mxu0 0.0
    %555 = vmatpush1.msra.mxu0 0.0
    %556 = vmatprep.subr.mxu0 0.0
    %557 = vmatpush1.msra.mxu0 0.0
    %558 = vmatprep.subr.mxu0 0.0
    %559 = vmatpush1.msra.mxu0 0.0
    %560 = vmatprep.subr.mxu0 0.0
    %561 = vmatpush1.msra.mxu0 0.0
    %562 = vmatprep.subr.mxu0 0.0
    %563 = vmatpush1.msra.mxu0 0.0
    %564 = vmatprep.subr.mxu0 0.0
    %565 = vmatpush1.msra.mxu0 0.0
    %566 = vmatprep.subr.mxu0 0.0
    %567 = vmatpush1.msra.mxu0 0.0
    %568 = vmatprep.subr.mxu0 0.0
    %569 = vmatpush1.msra.mxu0 0.0
    %570 = vmatprep.subr.mxu0 0.0
    %571 = vmatpush1.msra.mxu0 0.0
    %572 = vmatprep.subr.mxu0 0.0
    %573 = vmatpush1.msra.mxu0 0.0
    %574 = vmatprep.subr.mxu0 0.0
    %575 = vmatpush1.msra.mxu0 0.0
    %576 = vmatprep.subr.mxu0 0.0
    %577 = vmatpush1.msra.mxu0 0.0
    %578 = vmatprep.subr.mxu0 0.0
    %579 = vmatpush1.msra.mxu0 0.0
    %580 = vmatprep.subr.mxu0 0.0
    %581 = vmatpush1.msra.mxu0 0.0
    %582 = vmatprep.subr.mxu0 0.0
    %583 = vmatpush1.msra.mxu0 0.0
    %584 = vmatprep.subr.mxu0 0.0
    %585 = vmatpush1.msra.mxu0 0.0
    %586 = vmatprep.subr.mxu0 0.0
    %587 = vmatpush1.msra.mxu0 0.0
    %588 = vmatprep.subr.mxu0 0.0
    %589 = vmatpush1.msra.mxu0 0.0
    %590 = vmatprep.subr.mxu0 0.0
    %591 = vmatpush1.msra.mxu0 0.0
    %592 = vmatprep.mubr.f32.mxu0 0.0
    %593 = vmatmul.mubr.f32.gmra.mrb[0].mxu0 %v122
    %v594 = vpop.f32.mrb[0].mxu0
    %v595 = vadd.f32 0.0, %v594
    %v596 = vpop.f32.mrb[0].mxu0
    %v597 = vadd.f32 0.0, %v596
    %598 = vdwg.mxu0
    %599 = vmatprep.subr.mxu0 %v53
    %600 = vmatpush1.msra.mxu0 %v52
    %601 = vmatprep.subr.mxu0 %v69
    %602 = vmatpush1.msra.mxu0 %v68
    %603 = vmatprep.subr.mxu0 %v85
    %604 = vmatpush1.msra.mxu0 %v84
    %605 = vmatprep.subr.mxu0 %v101
    %606 = vmatpush1.msra.mxu0 %v100
    %607 = vmatprep.subr.mxu0 %v165
    %608 = vmatpush1.msra.mxu0 %v162
    %609 = vmatprep.subr.mxu0 0.0
    %610 = vmatpush1.msra.mxu0 0.0
    %611 = vmatprep.subr.mxu0 0.0
    %612 = vmatpush1.msra.mxu0 0.0
    %613 = vmatprep.subr.mxu0 0.0
    %614 = vmatpush1.msra.mxu0 0.0
    %615 = vmatprep.subr.mxu0 0.0
    %616 = vmatpush1.msra.mxu0 0.0
    %617 = vmatprep.subr.mxu0 0.0
    %618 = vmatpush1.msra.mxu0 0.0
    %619 = vmatprep.subr.mxu0 0.0
    %620 = vmatpush1.msra.mxu0 0.0
    %621 = vmatprep.subr.mxu0 0.0
    %622 = vmatpush1.msra.mxu0 0.0
    %623 = vmatprep.subr.mxu0 0.0
    %624 = vmatpush1.msra.mxu0 0.0
    %625 = vmatprep.subr.mxu0 0.0
    %626 = vmatpush1.msra.mxu0 0.0
    %627 = vmatprep.subr.mxu0 0.0
    %628 = vmatpush1.msra.mxu0 0.0
    %629 = vmatprep.subr.mxu0 0.0
    %630 = vmatpush1.msra.mxu0 0.0
    %631 = vmatprep.subr.mxu0 0.0
    %632 = vmatpush1.msra.mxu0 0.0
    %633 = vmatprep.subr.mxu0 0.0
    %634 = vmatpush1.msra.mxu0 0.0
    %635 = vmatprep.subr.mxu0 0.0
    %636 = vmatpush1.msra.mxu0 0.0
    %637 = vmatprep.subr.mxu0 0.0
    %638 = vmatpush1.msra.mxu0 0.0
    %639 = vmatprep.subr.mxu0 0.0
    %640 = vmatpush1.msra.mxu0 0.0
    %641 = vmatprep.subr.mxu0 0.0
    %642 = vmatpush1.msra.mxu0 0.0
    %643 = vmatprep.subr.mxu0 0.0
    %644 = vmatpush1.msra.mxu0 0.0
    %645 = vmatprep.subr.mxu0 0.0
    %646 = vmatpush1.msra.mxu0 0.0
    %647 = vmatprep.subr.mxu0 0.0
    %648 = vmatpush1.msra.mxu0 0.0
    %649 = vmatprep.subr.mxu0 0.0
    %650 = vmatpush1.msra.mxu0 0.0
    %651 = vmatprep.subr.mxu0 0.0
    %652 = vmatpush1.msra.mxu0 0.0
    %653 = vmatprep.subr.mxu0 0.0
    %654 = vmatpush1.msra.mxu0 0.0
    %655 = vmatprep.subr.mxu0 0.0
    %656 = vmatpush1.msra.mxu0 0.0
    %657 = vmatprep.subr.mxu0 0.0
    %658 = vmatpush1.msra.mxu0 0.0
    %659 = vmatprep.subr.mxu0 0.0
    %660 = vmatpush1.msra.mxu0 0.0
    %661 = vmatprep.subr.mxu0 0.0
    %662 = vmatpush1.msra.mxu0 0.0
    %663 = vmatprep.mubr.f32.mxu0 0.0
    %664 = vmatmul.mubr.f32.gmra.mrb[0].mxu0 %v122
    %v665 = vpop.f32.mrb[0].mxu0
    %v666 = vadd.f32 0.0, %v665
    %v667 = vpop.f32.mrb[0].mxu0
    %v668 = vadd.f32 0.0, %v667
    %669 = vdwg.mxu0
    %670 = vmatprep.subr.mxu0 %v55
    %671 = vmatpush1.msra.mxu0 %v54
    %672 = vmatprep.subr.mxu0 %v71
    %673 = vmatpush1.msra.mxu0 %v70
    %674 = vmatprep.subr.mxu0 %v87
    %675 = vmatpush1.msra.mxu0 %v86
    %676 = vmatprep.subr.mxu0 %v103
    %677 = vmatpush1.msra.mxu0 %v102
    %678 = vmatprep.subr.mxu0 %v171
    %679 = vmatpush1.msra.mxu0 %v168
    %680 = vmatprep.subr.mxu0 0.0
    %681 = vmatpush1.msra.mxu0 0.0
    %682 = vmatprep.subr.mxu0 0.0
    %683 = vmatpush1.msra.mxu0 0.0
    %684 = vmatprep.subr.mxu0 0.0
    %685 = vmatpush1.msra.mxu0 0.0
    %686 = vmatprep.subr.mxu0 0.0
    %687 = vmatpush1.msra.mxu0 0.0
    %688 = vmatprep.subr.mxu0 0.0
    %689 = vmatpush1.msra.mxu0 0.0
    %690 = vmatprep.subr.mxu0 0.0
    %691 = vmatpush1.msra.mxu0 0.0
    %692 = vmatprep.subr.mxu0 0.0
    %693 = vmatpush1.msra.mxu0 0.0
    %694 = vmatprep.subr.mxu0 0.0
    %695 = vmatpush1.msra.mxu0 0.0
    %696 = vmatprep.subr.mxu0 0.0
    %697 = vmatpush1.msra.mxu0 0.0
    %698 = vmatprep.subr.mxu0 0.0
    %699 = vmatpush1.msra.mxu0 0.0
    %700 = vmatprep.subr.mxu0 0.0
    %701 = vmatpush1.msra.mxu0 0.0
    %702 = vmatprep.subr.mxu0 0.0
    %703 = vmatpush1.msra.mxu0 0.0
    %704 = vmatprep.subr.mxu0 0.0
    %705 = vmatpush1.msra.mxu0 0.0
    %706 = vmatprep.subr.mxu0 0.0
    %707 = vmatpush1.msra.mxu0 0.0
    %708 = vmatprep.subr.mxu0 0.0
    %709 = vmatpush1.msra.mxu0 0.0
    %710 = vmatprep.subr.mxu0 0.0
    %711 = vmatpush1.msra.mxu0 0.0
    %712 = vmatprep.subr.mxu0 0.0
    %713 = vmatpush1.msra.mxu0 0.0
    %714 = vmatprep.subr.mxu0 0.0
    %715 = vmatpush1.msra.mxu0 0.0
    %716 = vmatprep.subr.mxu0 0.0
    %717 = vmatpush1.msra.mxu0 0.0
    %718 = vmatprep.subr.mxu0 0.0
    %719 = vmatpush1.msra.mxu0 0.0
    %720 = vmatprep.subr.mxu0 0.0
    %721 = vmatpush1.msra.mxu0 0.0
    %722 = vmatprep.subr.mxu0 0.0
    %723 = vmatpush1.msra.mxu0 0.0
    %724 = vmatprep.subr.mxu0 0.0
    %725 = vmatpush1.msra.mxu0 0.0
    %726 = vmatprep.subr.mxu0 0.0
    %727 = vmatpush1.msra.mxu0 0.0
    %728 = vmatprep.subr.mxu0 0.0
    %729 = vmatpush1.msra.mxu0 0.0
    %730 = vmatprep.subr.mxu0 0.0
    %731 = vmatpush1.msra.mxu0 0.0
    %732 = vmatprep.subr.mxu0 0.0
    %733 = vmatpush1.msra.mxu0 0.0
    %734 = vmatprep.mubr.f32.mxu0 0.0
    %735 = vmatmul.mubr.f32.gmra.mrb[0].mxu0 %v122
    %v736 = vpop.f32.mrb[0].mxu0
    %v737 = vadd.f32 0.0, %v736
    %v738 = vpop.f32.mrb[0].mxu0
    %v739 = vadd.f32 0.0, %v738
    %740 = vdwg.mxu0
    %s741 = smul.u32 0, 2048
    %v758 = vcombine.low %v240, %v242
    %v759 = vcombine.low %v311, %v313
    %v760 = vcombine.low %v382, %v384
    %v761 = vcombine.low %v453, %v455
    %v762 = vcombine.low %v524, %v526
    %v763 = vcombine.low %v595, %v597
    %v764 = vcombine.low %v666, %v668
    %v765 = vcombine.low %v737, %v739
    %s774 = sshra.s32 %s741, 7
    %s775 = sand.u32 %s741, 127
    %s776 = smul.addr %s774, 4
    %s777 = scalar_lea.vmem [#allocation7], %s776
    %778 = vst [vmem:[%s777] sm:$0xff] %v758
    %779 = vst [vmem:[%s777 + $0x8] sm:$0xff] %v759
    %780 = vst [vmem:[%s777 + $0x10] sm:$0xff] %v760
    %781 = vst [vmem:[%s777 + $0x18] sm:$0xff] %v761
    %782 = vst [vmem:[%s777 + $0x20] sm:$0xff] %v762
    %783 = vst [vmem:[%s777 + $0x28] sm:$0xff] %v763
    %784 = vst [vmem:[%s777 + $0x30] sm:$0xff] %v764
    %785 = vst [vmem:[%s777 + $0x38] sm:$0xff] %v765
    %v786 = vld [vmem:[#allocation2] sm:$0xf]
    %v787 = vsel %vm124, %v240, 0.0
    %v788 = vsel %vm124, %v242, 0.0
    %v789 = vadd.f32 %v787, %v788
    %v790 = vsel %vm124, %v311, 0.0
    %v791 = vadd.f32 %v789, %v790
    %v792 = vsel %vm124, %v313, 0.0
    %v793 = vadd.f32 %v791, %v792
    %v794 = vsel %vm124, %v382, 0.0
    %v795 = vadd.f32 %v793, %v794
    %v796 = vsel %vm124, %v384, 0.0
    %v797 = vadd.f32 %v795, %v796
    %v798 = vsel %vm124, %v453, 0.0
    %v799 = vadd.f32 %v797, %v798
    %v800 = vsel %vm124, %v455, 0.0
    %v801 = vadd.f32 %v799, %v800
    %v802 = vsel %vm124, %v524, 0.0
    %v803 = vadd.f32 %v801, %v802
    %v804 = vsel %vm124, %v526, 0.0
    %v805 = vadd.f32 %v803, %v804
    %v806 = vsel %vm124, %v595, 0.0
    %v807 = vadd.f32 %v805, %v806
    %v808 = vsel %vm124, %v597, 0.0
    %v809 = vadd.f32 %v807, %v808
    %v810 = vsel %vm124, %v666, 0.0
    %v811 = vadd.f32 %v809, %v810
    %v812 = vsel %vm124, %v668, 0.0
    %v813 = vadd.f32 %v811, %v812
    %v814 = vsel %vm124, %v737, 0.0
    %v815 = vadd.f32 %v813, %v814
    %v816 = vsel %vm124, %v739, 0.0
    %v817 = vadd.f32 %v815, %v816
    %818 = vadd.xlane.f32.xlu0 %v817
    %v819 = vpop.xlane.xlu0 %818
    %v820 = vadd.f32 %v786, %v819
    %vm821 = vcmask 3072
    %822 = vst.msk [vmem:[#allocation2] sm:$0xf] %vm821, %v820
    %v823 = vld [vmem:[#allocation3] sm:$0xf]
    %v824 = vmul.f32 %v240, %v240
    %v825 = vmul.f32 %v242, %v242
    %v826 = vmul.f32 %v311, %v311
    %v827 = vmul.f32 %v313, %v313
    %v828 = vmul.f32 %v382, %v382
    %v829 = vmul.f32 %v384, %v384
    %v830 = vmul.f32 %v453, %v453
    %v831 = vmul.f32 %v455, %v455
    %v832 = vmul.f32 %v524, %v524
    %v833 = vmul.f32 %v526, %v526
    %v834 = vmul.f32 %v595, %v595
    %v835 = vmul.f32 %v597, %v597
    %v836 = vmul.f32 %v666, %v666
    %v837 = vmul.f32 %v668, %v668
    %v838 = vmul.f32 %v737, %v737
    %v839 = vmul.f32 %v739, %v739
    %v840 = vsel %vm124, %v824, 0.0
    %v841 = vsel %vm124, %v825, 0.0
    %v842 = vadd.f32 %v840, %v841
    %v843 = vsel %vm124, %v826, 0.0
    %v844 = vadd.f32 %v842, %v843
    %v845 = vsel %vm124, %v827, 0.0
    %v846 = vadd.f32 %v844, %v845
    %v847 = vsel %vm124, %v828, 0.0
    %v848 = vadd.f32 %v846, %v847
    %v849 = vsel %vm124, %v829, 0.0
    %v850 = vadd.f32 %v848, %v849
    %v851 = vsel %vm124, %v830, 0.0
    %v852 = vadd.f32 %v850, %v851
    %v853 = vsel %vm124, %v831, 0.0
    %v854 = vadd.f32 %v852, %v853
    %v855 = vsel %vm124, %v832, 0.0
    %v856 = vadd.f32 %v854, %v855
    %v857 = vsel %vm124, %v833, 0.0
    %v858 = vadd.f32 %v856, %v857
    %v859 = vsel %vm124, %v834, 0.0
    %v860 = vadd.f32 %v858, %v859
    %v861 = vsel %vm124, %v835, 0.0
    %v862 = vadd.f32 %v860, %v861
    %v863 = vsel %vm124, %v836, 0.0
    %v864 = vadd.f32 %v862, %v863
    %v865 = vsel %vm124, %v837, 0.0
    %v866 = vadd.f32 %v864, %v865
    %v867 = vsel %vm124, %v838, 0.0
    %v868 = vadd.f32 %v866, %v867
    %v869 = vsel %vm124, %v839, 0.0
    %v870 = vadd.f32 %v868, %v869
    %871 = vadd.xlane.f32.xlu0 %v870
    %v872 = vpop.xlane.xlu0 %871
    %v873 = vadd.f32 %v823, %v872
    %874 = vst.msk [vmem:[#allocation3] sm:$0xf] %vm821, %v873
    // Predicated region
    $region26: #{tpu_custom_call.1} parent=1 // pred_check
      %p875 = pneg %p32
    $region27: #{tpu_custom_call.1} parent=1 // pred_check_branch
      %877 = sbr.rel (%p875) target = $region29
    $region28: #{tpu_custom_call.1} parent=1 // pred_region
      %v878 = vld [vmem:[#allocation2] sm:$0xf]
      %v879 = vmul.f32 %v878, 0.00048828125
      %v880 = vld [vmem:[#allocation3] sm:$0xf]
      %v881 = vmul.f32 %v880, 0.00048828125
      %v882 = vmul.f32 %v879, %v879
      %v883 = vsub.f32 %v881, %v882
      %v884 = vld [vmem:[%s2] sm:$0xf]
      %v885 = vadd.f32 %v883, 1e-05
      %v886 = vrsqrt.pop %v885
      %v887 = vmul.f32 %v884, %v886
      %v888 = vld [vmem:[%s3] sm:$0xf]
      %v889 = vmul.f32 %v879, %v887
      %v890 = vsub.f32 %v888, %v889
      %v891 = vld [vmem:[#allocation7] sm:$0xff]
      %v892 = vld [vmem:[#allocation7 + $0x8] sm:$0xff]
      %v893 = vld [vmem:[#allocation7 + $0x10] sm:$0xff]
      %v894 = vld [vmem:[#allocation7 + $0x18] sm:$0xff]
      %v895 = vld [vmem:[#allocation7 + $0x20] sm:$0xff]
      %v896 = vld [vmem:[#allocation7 + $0x28] sm:$0xff]
      %v897 = vld [vmem:[#allocation7 + $0x30] sm:$0xff]
      %v898 = vld [vmem:[#allocation7 + $0x38] sm:$0xff]
      %900 = vset.pattern.permute.xlu0 0
      %901 = vperm.xlu0 %900, %v887
      %v902 = vpop.permute.xlu0 %901
      %v904 = vunpack.c.l.s4 839922192
      %v905 = vunpack.c.0.s8 %v904
      %v906 = vlaneseq
      %v907 = vshrl.u32 %v906, 7
      %v908 = vsub.s32 %v905, %v907
      %v909 = vrot.slane %v902, %v908
      %v911 = vmul.f32 %v891, %v909
      %v912 = vmul.f32 %v892, %v909
      %v913 = vmul.f32 %v893, %v909
      %v914 = vmul.f32 %v894, %v909
      %v915 = vmul.f32 %v895, %v909
      %v916 = vmul.f32 %v896, %v909
      %v917 = vmul.f32 %v897, %v909
      %v918 = vmul.f32 %v898, %v909
      %920 = vset.pattern.permute.xlu0 0
      %921 = vperm.xlu0 %920, %v890
      %v922 = vpop.permute.xlu0 %921
      %v924 = vunpack.c.l.s4 839922192
      %v925 = vunpack.c.0.s8 %v924
      %v926 = vlaneseq
      %v927 = vshrl.u32 %v926, 7
      %v928 = vsub.s32 %v925, %v927
      %v929 = vrot.slane %v922, %v928
      %v931 = vadd.f32 %v911, %v929
      %v932 = vadd.f32 %v912, %v929
      %v933 = vadd.f32 %v913, %v929
      %v934 = vadd.f32 %v914, %v929
      %v935 = vadd.f32 %v915, %v929
      %v936 = vadd.f32 %v916, %v929
      %v937 = vadd.f32 %v917, %v929
      %v938 = vadd.f32 %v918, %v929
      %vm939 = vcmp.ge.f32.partialorder %v931, 0.0
      %vm940 = vcmp.ge.f32.partialorder %v932, 0.0
      %vm941 = vcmp.ge.f32.partialorder %v933, 0.0
      %vm942 = vcmp.ge.f32.partialorder %v934, 0.0
      %vm943 = vcmp.ge.f32.partialorder %v935, 0.0
      %vm944 = vcmp.ge.f32.partialorder %v936, 0.0
      %vm945 = vcmp.ge.f32.partialorder %v937, 0.0
      %vm946 = vcmp.ge.f32.partialorder %v938, 0.0
      %v947 = vmul.f32 %v931, 0.01
      %v948 = vmul.f32 %v932, 0.01
      %v949 = vmul.f32 %v933, 0.01
      %v950 = vmul.f32 %v934, 0.01
      %v951 = vmul.f32 %v935, 0.01
      %v952 = vmul.f32 %v936, 0.01
      %v953 = vmul.f32 %v937, 0.01
      %v954 = vmul.f32 %v938, 0.01
      %v955 = vsel %vm939, %v931, %v947
      %v956 = vsel %vm940, %v932, %v948
      %v957 = vsel %vm941, %v933, %v949
      %v958 = vsel %vm942, %v934, %v950
      %v959 = vsel %vm943, %v935, %v951
      %v960 = vsel %vm944, %v936, %v952
      %v961 = vsel %vm945, %v937, %v953
      %v962 = vsel %vm946, %v938, %v954
      %963 = vst [vmem:[#allocation7] sm:$0xff] %v955
      %964 = vst [vmem:[#allocation7 + $0x8] sm:$0xff] %v956
      %965 = vst [vmem:[#allocation7 + $0x10] sm:$0xff] %v957
      %966 = vst [vmem:[#allocation7 + $0x18] sm:$0xff] %v958
      %967 = vst [vmem:[#allocation7 + $0x20] sm:$0xff] %v959
      %968 = vst [vmem:[#allocation7 + $0x28] sm:$0xff] %v960
      %969 = vst [vmem:[#allocation7 + $0x30] sm:$0xff] %v961
      %970 = vst [vmem:[#allocation7 + $0x38] sm:$0xff] %v962
    $region29: #{tpu_custom_call.1} parent=1 // pred_fallthru
      _
    // Predicated region
    $region30: #{tpu_custom_call.1} parent=1 // pred_check
      _
    $region31: #{tpu_custom_call.1} parent=1 // pred_check_branch
      %972 = sbr.rel (0) target = $region33
    $region32: #{tpu_custom_call.1} parent=1 // pred_region
      %s974 = ssub.s32 1024, 1024
      %975 = vsyncadd [#allocation6], %s974
      %s977 = sshll.u32 [#allocation7], 4
      %s978 = int_to_ptr.vmem [resolvable:$true] %s977
      %980 = dma.vmem_to_hbm [thread:$0]  %s978, 1024, %s4, [#allocation6]
    $region33: #{tpu_custom_call.1} parent=1 // pred_fallthru
      _
    // Predicated region
    $region34: #{tpu_custom_call.1} parent=1 // pred_check
      _
    $region35: #{tpu_custom_call.1} parent=1 // pred_check_branch
      %982 = sbr.rel (0) target = $region37
    $region36: #{tpu_custom_call.1} parent=1 // pred_region
      %983 = dma.done [#allocation6], 1024
    $region37: #{tpu_custom_call.1} parent=1 // pred_fallthru
      _
    %984 = vsyncpa [#allocation5], 1
    %985 = vsyncpa [#allocation6], 1

</llo_original>
